<compile_context>
chip_gen: v7x
topology: tpu7x:2x2x1
jax: 0.10.0
libtpu: 0.0.40
codegen_flags: <defaults>
</compile_context>

<pallas_src>
import math
import functools

import numpy as np
import jax
import jax.numpy as jnp
from jax.experimental import pallas as pl
from jax.experimental.pallas import tpu as pltpu

# Model hyper-params (small, consistent with CLIPLayer(n_head, n_embd))
N_HEAD = 4
N_EMBD = 32
D_HEAD = N_EMBD // N_HEAD
SEQ = 8
BATCH = 2
EPS = 1e-5
# Finite large-negative mask value. Safe because every query row always keeps
# at least its own (same-batch, j == i) key; a fully-masked row would softmax
# to a uniform distribution instead of zero.
NEG_INF = -1e30


def _layer_norm(x, gamma, beta):
    mu = jnp.mean(x, axis=-1, keepdims=True)
    var = jnp.mean((x - mu) ** 2, axis=-1, keepdims=True)
    return (x - mu) * jax.lax.rsqrt(var + EPS) * gamma + beta


def _clip_layer_kernel(x_ref, vec_ref, mat_ref, o_ref,
                       *, batch, seq, n_head, d_head):
    B, S, H, dh = batch, seq, n_head, d_head
    D = H * dh
    W = 4 * D                       # lane width of both slabs (== MLP hidden)
    BS = B * S
    R = B * H * S                   # rows of the per-(batch, head) matrices

    # ---- static views into the two packed parameter slabs (no per-param DMA,
    #      every lane slice starts at lane 0) ----
    ln1_g = vec_ref[0:1, 0:D]
    ln1_b = vec_ref[1:2, 0:D]
    b_qkv = vec_ref[2:3, :]                         # (1, W): [b_q*s | b_k | b_v | 0]
    b_o   = vec_ref[3:4, 0:D]
    ln2_g = vec_ref[4:5, 0:D]
    ln2_b = vec_ref[5:6, 0:D]
    b1    = vec_ref[6:7, :]                         # (1, 4D)
    b2    = vec_ref[7:8, 0:D]

    w_qkv     = mat_ref[0:D, :]                     # (D, W): [w_q*s | w_k | w_v | 0]
    w1        = mat_ref[D:2 * D, :]                 # (D, 4D)
    w2        = mat_ref[2 * D:6 * D, 0:D]           # (4D, D)
    w_o       = mat_ref[6 * D:10 * D, 0:D]          # (W, D), rows 2D:3D hold W_o
    head_mul  = mat_ref[10 * D:10 * D + R, :]       # (R, W) 0/1 head selector
    score_add = mat_ref[10 * D + R:10 * D + 2 * R, 0:BS]  # (R, BS) 0 / -1e30

    x = x_ref[...]                                  # (BS, D) float32

    # ---- LayerNorm 1 ----
    xn = _layer_norm(x, ln1_g, ln1_b)

    # ---- fused QKV projection (attention scale folded into Q weight/bias) ----
    qkv = jnp.dot(xn, w_qkv, preferred_element_type=jnp.float32) + b_qkv   # (BS, W)

    # Rotate K's lane group onto Q's lanes (XLU rotate; no lane-granular slice).
    # After the roll: lanes 0:D = K, lanes 2D:3D = 0 (the zero padding block).
    k_al = pltpu.roll(qkv, shift=3 * D, axis=1)

    # Per-(batch, head) replicated query rows: row r = (b*H + h)*S + i.
    # head_mul keeps head h's Q lanes [h*dh,(h+1)*dh) and V lanes
    # [2D+h*dh, 2D+(h+1)*dh); the V lanes contract against k_al's zeros.
    q_big = jnp.broadcast_to(qkv.reshape(B, 1, S, W), (B, H, S, W)).reshape(R, W)
    q_big = q_big * head_mul

    # Every per-(batch, head) score matrix from ONE contraction.
    s = jax.lax.dot_general(q_big, k_al, (((1,), (1,)), ((), ())),
                            preferred_element_type=jnp.float32)            # (R, BS)
    s = s + score_add                                # same-batch & causal mask

    # Softmax over keys (masked entries underflow to exactly 0).
    s = s - jnp.max(s, axis=-1, keepdims=True)
    p = jnp.exp(s)
    p = p * pl.reciprocal(jnp.sum(p, axis=-1, keepdims=True), approx=True)

    # P @ V for every (batch, head) at once; V sits in lanes 2D:3D of qkv.
    o_big = jnp.dot(p, qkv, preferred_element_type=jnp.float32)            # (R, W)
    o_big = o_big * head_mul
    # Heads of one batch live on disjoint lanes -> recombine with a plain sum.
    attn_cat = o_big.reshape(B, H, S, W).sum(axis=1).reshape(BS, W)

    # Out-projection: W_o occupies rows 2D:3D of w_o, matching attn_cat's lanes
    # (the garbage in lanes 0:D of attn_cat hits zero rows of w_o).
    attn_out = jnp.dot(attn_cat, w_o, preferred_element_type=jnp.float32) + b_o
    x2 = x + attn_out                                # residual 1

    # ---- LayerNorm 2 + MLP with QuickGELU ----
    xn2 = _layer_norm(x2, ln2_g, ln2_b)
    h1 = jnp.dot(xn2, w1, preferred_element_type=jnp.float32) + b1
    h1 = h1 * jax.nn.sigmoid(1.702 * h1)
    h2 = jnp.dot(h1, w2, preferred_element_type=jnp.float32) + b2

    o_ref[...] = x2 + h2                             # residual 2
    # NOTE: lane-dense (B, S*D) output layout intentionally skipped at these
    # toy dims (only a handful of masked vst's); revisit only if v5e-bound.


def _pack_params(p, batch, seq, n_head):
    """Wrapper-side (one-time, XLA/NumPy) packing of all parameters + masks
    into two VMEM slabs: a (8, 4D) vector tile and a (10D+2R, 4D) matrix slab.
    """
    d = p["ln1_g"].shape[0]
    dh = d // n_head
    w = 4 * d
    scale = 1.0 / math.sqrt(dh)
    f32 = jnp.float32

    def row(v):
        v = v.astype(f32).reshape(1, -1)
        return jnp.pad(v, ((0, 0), (0, w - v.shape[1])))

    def pad_lanes(a):
        a = a.astype(f32)
        return jnp.pad(a, ((0, 0), (0, w - a.shape[1])))

    # ---- vector slab: one (8, 4d) tile, one parameter per sublane row ----
    b_q = p["b_in"][0 * d:1 * d] * scale             # scale folded into Q bias
    b_kv = p["b_in"][1 * d:3 * d]
    vec_slab = jnp.concatenate([
        row(p["ln1_g"]), row(p["ln1_b"]),
        row(jnp.concatenate([b_q, b_kv])),           # fused QKV bias
        row(p["b_out"]),
        row(p["ln2_g"]), row(p["ln2_b"]),
        row(p["b1"]), row(p["b2"]),
    ], axis=0)                                       # (8, 4d)

    # ---- matrix + mask slab (lane width 4d, all sub-blocks at lane 0) ----
    w_q = p["w_in"][:, 0 * d:1 * d] * scale          # scale folded into Q weight
    w_kv = p["w_in"][:, 1 * d:3 * d]
    w_qkv = pad_lanes(jnp.concatenate([w_q, w_kv], axis=1))     # (d, 4d)
    w1 = pad_lanes(p["w1"])                                      # (d, 4d)
    w2 = pad_lanes(p["w2"])                                      # (4d, 4d) lanes 0:d
    # W_o lifted to rows 2d:3d so it contracts directly against the attention
    # output that lives in lanes 2d:3d; all other rows are zero.
    w_o = jnp.zeros((4 * d, d), f32).at[2 * d:3 * d, :].set(p["w_out"].astype(f32))
    w_o = pad_lanes(w_o)                                         # (4d, 4d)

    B, S, H = batch, seq, n_head
    R = B * H * S
    # Combined 0/1 head selector (Q lanes and V lanes of head h), shape (R, 4d).
    head = (np.arange(R) // S) % H
    lane = np.arange(w)
    in_q = (lane[None, :] // dh) == head[:, None]                  # lanes 0:d
    in_v = ((lane[None, :] >= 2 * d) & (lane[None, :] < 3 * d)
            & ((lane[None, :] - 2 * d) // dh == head[:, None]))    # lanes 2d:3d
    head_mul = (in_q | in_v).astype(np.float32)

    # Additive score mask: 0 where (same batch, j <= i), else NEG_INF.
    r_b = np.arange(R) // (H * S)
    r_i = np.arange(R) % S
    c_b = np.arange(B * S) // S
    c_j = np.arange(B * S) % S
    ok = (r_b[:, None] == c_b[None, :]) & (c_j[None, :] <= r_i[:, None])
    score_add = np.where(ok, 0.0, NEG_INF).astype(np.float32)      # (R, B*S)
    score_add = np.pad(score_add, ((0, 0), (0, w - B * S)))

    mat_slab = jnp.concatenate([
        w_qkv, w1, w2, w_o,
        jnp.asarray(head_mul), jnp.asarray(score_add),
    ], axis=0)                                       # (10d + 2R, 4d)

    return vec_slab, mat_slab


def clip_layer(x, params):
    """x: (B, S, D) float32. params: dict of weights (see init_params)."""
    B, S, D = x.shape
    vec_slab, mat_slab = _pack_params(params, B, S, N_HEAD)
    kernel = functools.partial(_clip_layer_kernel, batch=B, seq=S,
                               n_head=N_HEAD, d_head=D // N_HEAD)

    out2d = pl.pallas_call(
        kernel,
        out_shape=jax.ShapeDtypeStruct((B * S, D), jnp.float32),
        # Single gridless invocation: activations + both parameter slabs
        # (~230 KiB total) live as full blocks in VMEM -> 3 input DMAs.
        in_specs=[pl.BlockSpec(memory_space=pltpu.MemorySpace.VMEM)] * 3,
        out_specs=pl.BlockSpec(memory_space=pltpu.MemorySpace.VMEM),
    )(x.reshape(B * S, D), vec_slab, mat_slab)
    return out2d.reshape(B, S, D)


def init_params(key, d):
    ks = jax.random.split(key, 8)
    scale = 0.02
    return {
        "ln1_g": jnp.ones((d,), jnp.float32),
        "ln1_b": jnp.zeros((d,), jnp.float32),
        "w_in": scale * jax.random.normal(ks[0], (d, 3 * d), jnp.float32),
        "b_in": scale * jax.random.normal(ks[1], (3 * d,), jnp.float32),
        "w_out": scale * jax.random.normal(ks[2], (d, d), jnp.float32),
        "b_out": scale * jax.random.normal(ks[3], (d,), jnp.float32),
        "ln2_g": jnp.ones((d,), jnp.float32),
        "ln2_b": jnp.zeros((d,), jnp.float32),
        "w1": scale * jax.random.normal(ks[4], (d, 4 * d), jnp.float32),
        "b1": scale * jax.random.normal(ks[5], (4 * d,), jnp.float32),
        "w2": scale * jax.random.normal(ks[6], (4 * d, d), jnp.float32),
        "b2": scale * jax.random.normal(ks[7], (d,), jnp.float32),
    }


def clip_layer_ref(x, p):
    """Pure-JAX reference mirroring the PyTorch forward."""
    def ln(v, g, b):
        mu = jnp.mean(v, -1, keepdims=True)
        var = jnp.mean((v - mu) ** 2, -1, keepdims=True)
        return (v - mu) * jax.lax.rsqrt(var + EPS) * g + b

    B, S, D = x.shape
    residual = x
    h = ln(x, p["ln1_g"], p["ln1_b"])
    qkv = h @ p["w_in"] + p["b_in"]
    q, k, v = jnp.split(qkv, 3, axis=-1)
    q = q.reshape(B, S, N_HEAD, D_HEAD).transpose(0, 2, 1, 3)
    k = k.reshape(B, S, N_HEAD, D_HEAD).transpose(0, 2, 1, 3)
    v = v.reshape(B, S, N_HEAD, D_HEAD).transpose(0, 2, 1, 3)
    w = jnp.einsum("bhqd,bhkd->bhqk", q, k)
    mask = jnp.triu(jnp.ones((S, S), bool), 1)
    w = jnp.where(mask, -jnp.inf, w) / math.sqrt(D_HEAD)
    w = jax.nn.softmax(w, axis=-1)
    o = jnp.einsum("bhqk,bhkd->bhqd", w, v).transpose(0, 2, 1, 3).reshape(B, S, D)
    o = o @ p["w_out"] + p["b_out"]
    x1 = o + residual
    residual = x1
    h = ln(x1, p["ln2_g"], p["ln2_b"])
    h = h @ p["w1"] + p["b1"]
    h = h * jax.nn.sigmoid(1.702 * h)
    h = h @ p["w2"] + p["b2"]
    return h + residual


if __name__ == "__main__":
    key = jax.random.PRNGKey(0)
    kx, kp = jax.random.split(key)
    x = jax.random.normal(kx, (BATCH, SEQ, N_EMBD), jnp.float32)
    params = init_params(kp, N_EMBD)

    out = jax.block_until_ready(clip_layer(x, params))
    ref = clip_layer_ref(x, params)

    assert out.shape == (BATCH, SEQ, N_EMBD)
    err = float(jnp.max(jnp.abs(out - ref)))
    # tolerance slightly above 1e-4 to accommodate the approx (EUP) reciprocal
    assert err < 2e-4, f"mismatch vs reference: {err}"
    print("KERNEL_OK")
</pallas_src>

<mosaic_0001>
module attributes {stable_mosaic.version = 11 : i64} {
  func.func @_clip_layer_kernel(%arg0: memref<16x32xf32, #tpu.memory_space<vmem>>, %arg1: memref<8x128xf32, #tpu.memory_space<vmem>>, %arg2: memref<448x128xf32, #tpu.memory_space<vmem>>, %arg3: memref<16x32xf32, #tpu.memory_space<vmem>>) attributes {dimension_semantics = [], scalar_prefetch = 0 : i64, scratch_operands = 0 : i64, tpu.core_type = #tpu.core_type<tc>} {
    %c0 = arith.constant 0 : index
    %c0_0 = arith.constant 0 : index
    %0 = vector.load %arg1[%c0, %c0_0] : memref<8x128xf32, #tpu.memory_space<vmem>>, vector<1x32xf32>
    %c1 = arith.constant 1 : index
    %c0_1 = arith.constant 0 : index
    %1 = vector.load %arg1[%c1, %c0_1] : memref<8x128xf32, #tpu.memory_space<vmem>>, vector<1x32xf32>
    %c2 = arith.constant 2 : index
    %c0_2 = arith.constant 0 : index
    %2 = vector.load %arg1[%c2, %c0_2] : memref<8x128xf32, #tpu.memory_space<vmem>>, vector<1x128xf32>
    %c3 = arith.constant 3 : index
    %c0_3 = arith.constant 0 : index
    %3 = vector.load %arg1[%c3, %c0_3] : memref<8x128xf32, #tpu.memory_space<vmem>>, vector<1x32xf32>
    %c4 = arith.constant 4 : index
    %c0_4 = arith.constant 0 : index
    %4 = vector.load %arg1[%c4, %c0_4] : memref<8x128xf32, #tpu.memory_space<vmem>>, vector<1x32xf32>
    %c5 = arith.constant 5 : index
    %c0_5 = arith.constant 0 : index
    %5 = vector.load %arg1[%c5, %c0_5] : memref<8x128xf32, #tpu.memory_space<vmem>>, vector<1x32xf32>
    %c6 = arith.constant 6 : index
    %c0_6 = arith.constant 0 : index
    %6 = vector.load %arg1[%c6, %c0_6] : memref<8x128xf32, #tpu.memory_space<vmem>>, vector<1x128xf32>
    %c7 = arith.constant 7 : index
    %c0_7 = arith.constant 0 : index
    %7 = vector.load %arg1[%c7, %c0_7] : memref<8x128xf32, #tpu.memory_space<vmem>>, vector<1x32xf32>
    %c0_8 = arith.constant 0 : index
    %c0_9 = arith.constant 0 : index
    %8 = vector.load %arg2[%c0_8, %c0_9] : memref<448x128xf32, #tpu.memory_space<vmem>>, vector<32x128xf32>
    %c32 = arith.constant 32 : index
    %c0_10 = arith.constant 0 : index
    %9 = vector.load %arg2[%c32, %c0_10] : memref<448x128xf32, #tpu.memory_space<vmem>>, vector<32x128xf32>
    %c64 = arith.constant 64 : index
    %c0_11 = arith.constant 0 : index
    %10 = vector.load %arg2[%c64, %c0_11] : memref<448x128xf32, #tpu.memory_space<vmem>>, vector<128x32xf32>
    %c192 = arith.constant 192 : index
    %c0_12 = arith.constant 0 : index
    %11 = vector.load %arg2[%c192, %c0_12] : memref<448x128xf32, #tpu.memory_space<vmem>>, vector<128x32xf32>
    %c320 = arith.constant 320 : index
    %c0_13 = arith.constant 0 : index
    %12 = vector.load %arg2[%c320, %c0_13] : memref<448x128xf32, #tpu.memory_space<vmem>>, vector<64x128xf32>
    %c384 = arith.constant 384 : index
    %c0_14 = arith.constant 0 : index
    %13 = vector.load %arg2[%c384, %c0_14] : memref<448x128xf32, #tpu.memory_space<vmem>>, vector<64x16xf32>
    %c0_15 = arith.constant 0 : index
    %c0_16 = arith.constant 0 : index
    %14 = vector.load %arg0[%c0_15, %c0_16] : memref<16x32xf32, #tpu.memory_space<vmem>>, vector<16x32xf32>
    %cst = arith.constant dense<0.000000e+00> : vector<16xf32>
    %15 = vector.multi_reduction <add>, %14, %cst [1] : vector<16x32xf32> to vector<16xf32>
    %16 = vector.shape_cast %15 : vector<16xf32> to vector<16x1xf32>
    %cst_17 = arith.constant 3.200000e+01 : f32
    %17 = vector.broadcast %cst_17 : f32 to vector<16x1xf32>
    %18 = arith.divf %16, %17 : vector<16x1xf32>
    %19 = vector.broadcast %18 : vector<16x1xf32> to vector<16x32xf32>
    %20 = arith.subf %14, %19 : vector<16x32xf32>
    %21 = arith.mulf %20, %20 : vector<16x32xf32>
    %cst_18 = arith.constant dense<0.000000e+00> : vector<16xf32>
    %22 = vector.multi_reduction <add>, %21, %cst_18 [1] : vector<16x32xf32> to vector<16xf32>
    %23 = vector.shape_cast %22 : vector<16xf32> to vector<16x1xf32>
    %cst_19 = arith.constant 3.200000e+01 : f32
    %24 = vector.broadcast %cst_19 : f32 to vector<16x1xf32>
    %25 = arith.divf %23, %24 : vector<16x1xf32>
    %26 = vector.broadcast %18 : vector<16x1xf32> to vector<16x32xf32>
    %27 = arith.subf %14, %26 : vector<16x32xf32>
    %cst_20 = arith.constant 9.99999974E-6 : f32
    %28 = vector.broadcast %cst_20 : f32 to vector<16x1xf32>
    %29 = arith.addf %25, %28 : vector<16x1xf32>
    %30 = math.rsqrt %29 : vector<16x1xf32>
    %31 = vector.broadcast %30 : vector<16x1xf32> to vector<16x32xf32>
    %32 = arith.mulf %27, %31 : vector<16x32xf32>
    %33 = vector.broadcast %0 : vector<1x32xf32> to vector<16x32xf32>
    %34 = arith.mulf %32, %33 : vector<16x32xf32>
    %35 = vector.broadcast %1 : vector<1x32xf32> to vector<16x32xf32>
    %36 = arith.addf %34, %35 : vector<16x32xf32>
    %cst_21 = arith.constant dense<0.000000e+00> : vector<16x128xf32>
    %37 = tpu.matmul %36, %8, %cst_21 {dimension_numbers = #tpu.dot_dimension_numbers<[1], [0], [0], [1], [0, 0, 1, 1], [], []>} : vector<16x32xf32>, vector<32x128xf32>, vector<16x128xf32> -> vector<16x128xf32>
    %38 = vector.broadcast %2 : vector<1x128xf32> to vector<16x128xf32>
    %39 = arith.addf %37, %38 : vector<16x128xf32>
    %c96_i32 = arith.constant 96 : i32
    %40 = tpu.dynamic_rotate %39 by %c96_i32 dim 1 : vector<16x128xf32>, i32 -> vector<16x128xf32>
    %41 = vector.shape_cast %39 : vector<16x128xf32> to vector<2x1x8x128xf32>
    %42 = vector.shape_cast %41 : vector<2x1x8x128xf32> to vector<2x1x8x128xf32>
    %43 = vector.broadcast %42 : vector<2x1x8x128xf32> to vector<2x4x8x128xf32>
    %44 = vector.shape_cast %43 : vector<2x4x8x128xf32> to vector<64x128xf32>
    %45 = arith.mulf %44, %12 : vector<64x128xf32>
    %cst_22 = arith.constant dense<0.000000e+00> : vector<64x16xf32>
    %46 = tpu.matmul %45, %40, %cst_22 {dimension_numbers = #tpu.dot_dimension_numbers<[1], [1], [0], [0], [0, 0, 1, 0], [], []>} : vector<64x128xf32>, vector<16x128xf32>, vector<64x16xf32> -> vector<64x16xf32>
    %47 = arith.addf %46, %13 : vector<64x16xf32>
    %cst_23 = arith.constant dense<0xFF800000> : vector<64xf32>
    %48 = vector.multi_reduction <maximumf>, %47, %cst_23 [1] : vector<64x16xf32> to vector<64xf32>
    %49 = vector.shape_cast %48 : vector<64xf32> to vector<64x1xf32>
    %50 = vector.broadcast %49 : vector<64x1xf32> to vector<64x16xf32>
    %51 = arith.subf %47, %50 : vector<64x16xf32>
    %52 = math.exp %51 : vector<64x16xf32>
    %cst_24 = arith.constant dense<0.000000e+00> : vector<64xf32>
    %53 = vector.multi_reduction <add>, %52, %cst_24 [1] : vector<64x16xf32> to vector<64xf32>
    %54 = vector.shape_cast %53 : vector<64xf32> to vector<64x1xf32>
    %55 = tpu.reciprocal %54 {approx = true} : vector<64x1xf32> -> vector<64x1xf32>
    %56 = vector.broadcast %55 : vector<64x1xf32> to vector<64x16xf32>
    %57 = arith.mulf %52, %56 : vector<64x16xf32>
    %cst_25 = arith.constant dense<0.000000e+00> : vector<64x128xf32>
    %58 = tpu.matmul %57, %39, %cst_25 {dimension_numbers = #tpu.dot_dimension_numbers<[1], [0], [0], [1], [0, 0, 1, 1], [], []>} : vector<64x16xf32>, vector<16x128xf32>, vector<64x128xf32> -> vector<64x128xf32>
    %59 = arith.mulf %58, %12 : vector<64x128xf32>
    %60 = vector.shape_cast %59 : vector<64x128xf32> to vector<2x4x8x128xf32>
    %cst_26 = arith.constant dense<0.000000e+00> : vector<2x8x128xf32>
    %61 = vector.multi_reduction <add>, %60, %cst_26 [1] : vector<2x4x8x128xf32> to vector<2x8x128xf32>
    %62 = vector.shape_cast %61 : vector<2x8x128xf32> to vector<16x128xf32>
    %cst_27 = arith.constant dense<0.000000e+00> : vector<16x32xf32>
    %63 = tpu.matmul %62, %11, %cst_27 {dimension_numbers = #tpu.dot_dimension_numbers<[1], [0], [0], [1], [0, 0, 1, 1], [], []>} : vector<16x128xf32>, vector<128x32xf32>, vector<16x32xf32> -> vector<16x32xf32>
    %64 = vector.broadcast %3 : vector<1x32xf32> to vector<16x32xf32>
    %65 = arith.addf %63, %64 : vector<16x32xf32>
    %66 = arith.addf %14, %65 : vector<16x32xf32>
    %cst_28 = arith.constant dense<0.000000e+00> : vector<16xf32>
    %67 = vector.multi_reduction <add>, %66, %cst_28 [1] : vector<16x32xf32> to vector<16xf32>
    %68 = vector.shape_cast %67 : vector<16xf32> to vector<16x1xf32>
    %cst_29 = arith.constant 3.200000e+01 : f32
    %69 = vector.broadcast %cst_29 : f32 to vector<16x1xf32>
    %70 = arith.divf %68, %69 : vector<16x1xf32>
    %71 = vector.broadcast %70 : vector<16x1xf32> to vector<16x32xf32>
    %72 = arith.subf %66, %71 : vector<16x32xf32>
    %73 = arith.mulf %72, %72 : vector<16x32xf32>
    %cst_30 = arith.constant dense<0.000000e+00> : vector<16xf32>
    %74 = vector.multi_reduction <add>, %73, %cst_30 [1] : vector<16x32xf32> to vector<16xf32>
    %75 = vector.shape_cast %74 : vector<16xf32> to vector<16x1xf32>
    %cst_31 = arith.constant 3.200000e+01 : f32
    %76 = vector.broadcast %cst_31 : f32 to vector<16x1xf32>
    %77 = arith.divf %75, %76 : vector<16x1xf32>
    %78 = vector.broadcast %70 : vector<16x1xf32> to vector<16x32xf32>
    %79 = arith.subf %66, %78 : vector<16x32xf32>
    %cst_32 = arith.constant 9.99999974E-6 : f32
    %80 = vector.broadcast %cst_32 : f32 to vector<16x1xf32>
    %81 = arith.addf %77, %80 : vector<16x1xf32>
    %82 = math.rsqrt %81 : vector<16x1xf32>
    %83 = vector.broadcast %82 : vector<16x1xf32> to vector<16x32xf32>
    %84 = arith.mulf %79, %83 : vector<16x32xf32>
    %85 = vector.broadcast %4 : vector<1x32xf32> to vector<16x32xf32>
    %86 = arith.mulf %84, %85 : vector<16x32xf32>
    %87 = vector.broadcast %5 : vector<1x32xf32> to vector<16x32xf32>
    %88 = arith.addf %86, %87 : vector<16x32xf32>
    %cst_33 = arith.constant dense<0.000000e+00> : vector<16x128xf32>
    %89 = tpu.matmul %88, %9, %cst_33 {dimension_numbers = #tpu.dot_dimension_numbers<[1], [0], [0], [1], [0, 0, 1, 1], [], []>} : vector<16x32xf32>, vector<32x128xf32>, vector<16x128xf32> -> vector<16x128xf32>
    %90 = vector.broadcast %6 : vector<1x128xf32> to vector<16x128xf32>
    %91 = arith.addf %89, %90 : vector<16x128xf32>
    %cst_34 = arith.constant 1.702000e+00 : f32
    %92 = vector.broadcast %cst_34 : f32 to vector<16x128xf32>
    %93 = arith.mulf %92, %91 : vector<16x128xf32>
    %94 = arith.negf %93 : vector<16x128xf32>
    %95 = math.exp %94 : vector<16x128xf32>
    %cst_35 = arith.constant 1.000000e+00 : f32
    %96 = vector.broadcast %cst_35 : f32 to vector<16x128xf32>
    %97 = arith.addf %96, %95 : vector<16x128xf32>
    %98 = arith.divf %96, %97 : vector<16x128xf32>
    %99 = arith.mulf %91, %98 : vector<16x128xf32>
    %cst_36 = arith.constant dense<0.000000e+00> : vector<16x32xf32>
    %100 = tpu.matmul %99, %10, %cst_36 {dimension_numbers = #tpu.dot_dimension_numbers<[1], [0], [0], [1], [0, 0, 1, 1], [], []>} : vector<16x128xf32>, vector<128x32xf32>, vector<16x32xf32> -> vector<16x32xf32>
    %101 = vector.broadcast %7 : vector<1x32xf32> to vector<16x32xf32>
    %102 = arith.addf %100, %101 : vector<16x32xf32>
    %103 = arith.addf %66, %102 : vector<16x32xf32>
    %c0_37 = arith.constant 0 : index
    %c0_38 = arith.constant 0 : index
    %104 = vector.load %arg3[%c0_37, %c0_38] : memref<16x32xf32, #tpu.memory_space<vmem>>, vector<16x32xf32>
    tpu.vector_store %arg3[%c0_37, %c0_38], %103 {strides = array<i32>} : memref<16x32xf32, #tpu.memory_space<vmem>>, vector<16x32xf32>,
    return
  }
}

</mosaic_0001>

<llo_original>
// kernel: tpu_custom_call.1
$region0: #{tpu_custom_call.1}
  #allocation0 [shape = 'u32[]', space=smem, size = 0x4, offset = 0x4, fixed_abs, tag = 'smem constant byte address 0x4 - core index']
  #allocation1 [shape = 'u32[144,128]{1,0:T(1,128)}', space=vmem, size = 0x12000, scoped, tag = 'internal scratch']
  %s0 = inlined_call_operand.hbm [shape: f32[16,32], index: 0, kind: input, shape index: {}]
  %s1 = inlined_call_operand.hbm [shape: f32[8,128], index: 1, kind: input, shape index: {}]
  %s2 = inlined_call_operand.hbm [shape: f32[448,128], index: 2, kind: input, shape index: {}]
  %s3 = inlined_call_operand.hbm [shape: f32[16,32], index: 3, kind: output, shape index: {}]
  %s4 = sld [smem:[#allocation0]]
  $region34: #{tpu_custom_call.1} parent=0
    _
  %s6 = ssub.s32 1, %s4
  %s7 = scalar_select 0, %s6, %s4
  $region1: #{tpu_custom_call.1} parent=0
    #allocation2 [shape = 'u8[8192]{0}', space=vmem, size = 0x2000, scoped, tag = 'input window, operand 0, single buffered']
    #allocation3 [shape = 's32[1]{0}', space=sflag, size = 0x4, scoped, tag = 'scoped memory for tpu_custom_call.1']
    #allocation4 [shape = 's32[1]{0}', space=sflag, size = 0x4, scoped, tag = 'scoped memory for tpu_custom_call.1']
    #allocation5 [shape = 'u8[4096]{0}', space=vmem, size = 0x1000, scoped, tag = 'input window, operand 1, single buffered']
    #allocation6 [shape = 's32[1]{0}', space=sflag, size = 0x4, scoped, tag = 'scoped memory for tpu_custom_call.1']
    #allocation7 [shape = 'u8[229376]{0}', space=vmem, size = 0x38000, scoped, tag = 'input window, operand 2, single buffered']
    #allocation8 [shape = 'u8[8192]{0}', space=vmem, size = 0x2000, scoped, tag = 'output window, operand 0, single buffered']
    %8 = vsyncpa [#allocation3], 0
    %9 = vsyncpa [#allocation6], 0
    %10 = vsyncpa [#allocation4], 0
    // Predicated region
    $region2: #{tpu_custom_call.1} parent=1 // pred_check
      _
    $region3: #{tpu_custom_call.1} parent=1 // pred_check_branch
      %12 = sbr.rel (0) target = $region5
    $region4: #{tpu_custom_call.1} parent=1 // pred_region
      %s14 = ssub.s32 256, 256
      %15 = vsyncadd [#allocation3], %s14
      %s16 = sshll.u32 [#allocation2], 4
      %s17 = int_to_ptr.vmem [resolvable:$true] %s16
      %22 = dma.hbm_to_vmem [thread:$0]  %s0, 256, %s17, [#allocation3], 128, 128, 8
    $region5: #{tpu_custom_call.1} parent=1 // pred_fallthru
      _
    // Predicated region
    $region6: #{tpu_custom_call.1} parent=1 // pred_check
      _
    $region7: #{tpu_custom_call.1} parent=1 // pred_check_branch
      %24 = sbr.rel (0) target = $region9
    $region8: #{tpu_custom_call.1} parent=1 // pred_region
      %s26 = ssub.s32 128, 128
      %27 = vsyncadd [#allocation6], %s26
      %s29 = sshll.u32 [#allocation5], 4
      %s30 = int_to_ptr.vmem [resolvable:$true] %s29
      %32 = dma.hbm_to_vmem [thread:$0]  %s1, 128, %s30, [#allocation6]
    $region9: #{tpu_custom_call.1} parent=1 // pred_fallthru
      _
    // Predicated region
    $region10: #{tpu_custom_call.1} parent=1 // pred_check
      _
    $region11: #{tpu_custom_call.1} parent=1 // pred_check_branch
      %34 = sbr.rel (0) target = $region13
    $region12: #{tpu_custom_call.1} parent=1 // pred_region
      %s36 = ssub.s32 7168, 7168
      %37 = vsyncadd [#allocation6], %s36
      %s38 = sshll.u32 [#allocation7], 4
      %s39 = int_to_ptr.vmem [resolvable:$true] %s38
      %44 = dma.hbm_to_vmem [thread:$0]  %s2, 7168, %s39, [#allocation6], 128, 128, 8
    $region13: #{tpu_custom_call.1} parent=1 // pred_fallthru
      _
    // Predicated region
    $region14: #{tpu_custom_call.1} parent=1 // pred_check
      _
    $region15: #{tpu_custom_call.1} parent=1 // pred_check_branch
      %46 = sbr.rel (0) target = $region17
    $region16: #{tpu_custom_call.1} parent=1 // pred_region
      %47 = dma.done [#allocation3], 256
    $region17: #{tpu_custom_call.1} parent=1 // pred_fallthru
      _
    // Predicated region
    $region18: #{tpu_custom_call.1} parent=1 // pred_check
      _
    $region19: #{tpu_custom_call.1} parent=1 // pred_check_branch
      %49 = sbr.rel (0) target = $region21
    $region20: #{tpu_custom_call.1} parent=1 // pred_region
      %50 = dma.done [#allocation6], 128
    $region21: #{tpu_custom_call.1} parent=1 // pred_fallthru
      _
    // Predicated region
    $region22: #{tpu_custom_call.1} parent=1 // pred_check
      _
    $region23: #{tpu_custom_call.1} parent=1 // pred_check_branch
      %52 = sbr.rel (0) target = $region25
    $region24: #{tpu_custom_call.1} parent=1 // pred_region
      %53 = dma.done [#allocation6], 7168
    $region25: #{tpu_custom_call.1} parent=1 // pred_fallthru
      _
    %v54 = vld [vmem:[#allocation5] sm:$0x1]
    %v55 = vld [vmem:[#allocation5 + $0x1] sm:$0x1]
    %v56 = vld [vmem:[#allocation5 + $0x2] sm:$0x1]
    %v57 = vld [vmem:[#allocation5 + $0x3] sm:$0x1]
    %v58 = vld [vmem:[#allocation5 + $0x4] sm:$0x1]
    %v59 = vld [vmem:[#allocation5 + $0x5] sm:$0x1]
    %v60 = vld [vmem:[#allocation5 + $0x6] sm:$0x1]
    %v61 = vld [vmem:[#allocation5 + $0x7] sm:$0x1]
    %v62 = vld [vmem:[#allocation7] sm:$0xff]
    %v63 = vld [vmem:[#allocation7 + $0x8] sm:$0xff]
    %v64 = vld [vmem:[#allocation7 + $0x10] sm:$0xff]
    %v65 = vld [vmem:[#allocation7 + $0x18] sm:$0xff]
    %v66 = vld [vmem:[#allocation7 + $0x20] sm:$0xff]
    %v67 = vld [vmem:[#allocation7 + $0x28] sm:$0xff]
    %v68 = vld [vmem:[#allocation7 + $0x30] sm:$0xff]
    %v69 = vld [vmem:[#allocation7 + $0x38] sm:$0xff]
    %v70 = vld [vmem:[#allocation7 + $0x40] sm:$0xff]
    %v71 = vld [vmem:[#allocation7 + $0x48] sm:$0xff]
    %v72 = vld [vmem:[#allocation7 + $0x50] sm:$0xff]
    %v73 = vld [vmem:[#allocation7 + $0x58] sm:$0xff]
    %v74 = vld [vmem:[#allocation7 + $0x60] sm:$0xff]
    %v75 = vld [vmem:[#allocation7 + $0x68] sm:$0xff]
    %v76 = vld [vmem:[#allocation7 + $0x70] sm:$0xff]
    %v77 = vld [vmem:[#allocation7 + $0x78] sm:$0xff]
    %v78 = vld [vmem:[#allocation7 + $0x80] sm:$0xff]
    %v79 = vld [vmem:[#allocation7 + $0x88] sm:$0xff]
    %v80 = vld [vmem:[#allocation7 + $0x90] sm:$0xff]
    %v81 = vld [vmem:[#allocation7 + $0x98] sm:$0xff]
    %v82 = vld [vmem:[#allocation7 + $0xa0] sm:$0xff]
    %v83 = vld [vmem:[#allocation7 + $0xa8] sm:$0xff]
    %v84 = vld [vmem:[#allocation7 + $0xb0] sm:$0xff]
    %v85 = vld [vmem:[#allocation7 + $0xb8] sm:$0xff]
    %v86 = vld [vmem:[#allocation7 + $0xc0] sm:$0xff]
    %v87 = vld [vmem:[#allocation7 + $0xc8] sm:$0xff]
    %v88 = vld [vmem:[#allocation7 + $0xd0] sm:$0xff]
    %v89 = vld [vmem:[#allocation7 + $0xd8] sm:$0xff]
    %v90 = vld [vmem:[#allocation7 + $0xe0] sm:$0xff]
    %v91 = vld [vmem:[#allocation7 + $0xe8] sm:$0xff]
    %v92 = vld [vmem:[#allocation7 + $0xf0] sm:$0xff]
    %v93 = vld [vmem:[#allocation7 + $0xf8] sm:$0xff]
    %v94 = vld [vmem:[#allocation7 + $0x100] sm:$0xff]
    %v95 = vld [vmem:[#allocation7 + $0x108] sm:$0xff]
    %v96 = vld [vmem:[#allocation7 + $0x110] sm:$0xff]
    %v97 = vld [vmem:[#allocation7 + $0x118] sm:$0xff]
    %v98 = vld [vmem:[#allocation7 + $0x120] sm:$0xff]
    %v99 = vld [vmem:[#allocation7 + $0x128] sm:$0xff]
    %v100 = vld [vmem:[#allocation7 + $0x130] sm:$0xff]
    %v101 = vld [vmem:[#allocation7 + $0x138] sm:$0xff]
    %v102 = vld [vmem:[#allocation7 + $0x140] sm:$0xff]
    %v103 = vld [vmem:[#allocation7 + $0x148] sm:$0xff]
    %v104 = vld [vmem:[#allocation7 + $0x150] sm:$0xff]
    %v105 = vld [vmem:[#allocation7 + $0x158] sm:$0xff]
    %v106 = vld [vmem:[#allocation7 + $0x160] sm:$0xff]
    %v107 = vld [vmem:[#allocation7 + $0x168] sm:$0xff]
    %v108 = vld [vmem:[#allocation7 + $0x170] sm:$0xff]
    %v109 = vld [vmem:[#allocation7 + $0x178] sm:$0xff]
    %v110 = vld [vmem:[#allocation7 + $0x180] sm:$0xff]
    %v111 = vld [vmem:[#allocation7 + $0x188] sm:$0xff]
    %v112 = vld [vmem:[#allocation7 + $0x190] sm:$0xff]
    %v113 = vld [vmem:[#allocation7 + $0x198] sm:$0xff]
    %v114 = vld [vmem:[#allocation7 + $0x1a0] sm:$0xff]
    %v115 = vld [vmem:[#allocation7 + $0x1a8] sm:$0xff]
    %v116 = vld [vmem:[#allocation7 + $0x1b0] sm:$0xff]
    %v117 = vld [vmem:[#allocation7 + $0x1b8] sm:$0xff]
    %v118 = vld [vmem:[#allocation2] sm:$0xff]
    %v119 = vld [vmem:[#allocation2 + $0x8] sm:$0xff]
    %vm120 = vcmask 261120
    %v121 = vsel %vm120, %v118, 0.0
    %122 = vadd.xlane.f32.xlu0 %v121
    %v123 = vpop.xlane.xlu0 %122
    %v124 = vsel %vm120, %v119, 0.0
    %125 = vadd.xlane.f32.xlu0 %v124
    %v126 = vpop.xlane.xlu0 %125
    %v127 = vrcp.pop 32.0
    %v128 = vmul.f32 %v123, %v127
    %v129 = vmul.f32 %v126, %v127
    %v130 = vsub.f32 %v118, %v128
    %v131 = vsub.f32 %v119, %v129
    %v132 = vmul.f32 %v130, %v130
    %v133 = vmul.f32 %v131, %v131
    %v134 = vsel %vm120, %v132, 0.0
    %135 = vadd.xlane.f32.xlu0 %v134
    %v136 = vpop.xlane.xlu0 %135
    %v137 = vsel %vm120, %v133, 0.0
    %138 = vadd.xlane.f32.xlu0 %v137
    %v139 = vpop.xlane.xlu0 %138
    %v140 = vmul.f32 %v136, %v127
    %v141 = vmul.f32 %v139, %v127
    %v142 = vadd.f32 %v140, 1e-05
    %v143 = vadd.f32 %v141, 1e-05
    %v144 = vrsqrt.pop %v142
    %v145 = vrsqrt.pop %v143
    %v146 = vmul.f32 %v130, %v144
    %v147 = vmul.f32 %v131, %v145
    %v148 = vlaneseq
    %v149 = vshrl.u32 %v148, 7
    %v150 = vsub.s32 0, %v149
    %v151 = vrot.slane %v54, %v150
    %v152 = vmul.f32 %v146, %v151
    %v153 = vmul.f32 %v147, %v151
    %v154 = vlaneseq
    %v155 = vshrl.u32 %v154, 7
    %v156 = vsub.s32 0, %v155
    %v157 = vrot.slane %v55, %v156
    %v158 = vadd.f32 %v152, %v157
    %v159 = vadd.f32 %v153, %v157
    %v160 = vlaneseq
    %v161 = vshrl.u32 %v160, 7
    %v162 = vsub.s32 0, %v161
    %v163 = vrot.slane %v56, %v162
    %v165 = vsel %vm120, %v158, 0
    %v168 = vsel %vm120, %v159, 0
    %170 = vmatprep.subr.mxu0 0.0
    %171 = vmatpush1.msra.mxu0 %v62
    %172 = vmatprep.subr.mxu0 0.0
    %173 = vmatpush1.msra.mxu0 %v63
    %174 = vmatprep.subr.mxu0 0.0
    %175 = vmatpush1.msra.mxu0 %v64
    %176 = vmatprep.subr.mxu0 0.0
    %177 = vmatpush1.msra.mxu0 %v65
    %178 = vmatprep.subr.mxu0 0.0
    %179 = vmatpush1.msra.mxu0 0.0
    %180 = vmatprep.subr.mxu0 0.0
    %181 = vmatpush1.msra.mxu0 0.0
    %182 = vmatprep.subr.mxu0 0.0
    %183 = vmatpush1.msra.mxu0 0.0
    %184 = vmatprep.subr.mxu0 0.0
    %185 = vmatpush1.msra.mxu0 0.0
    %186 = vmatprep.subr.mxu0 0.0
    %187 = vmatpush1.msra.mxu0 0.0
    %188 = vmatprep.subr.mxu0 0.0
    %189 = vmatpush1.msra.mxu0 0.0
    %190 = vmatprep.subr.mxu0 0.0
    %191 = vmatpush1.msra.mxu0 0.0
    %192 = vmatprep.subr.mxu0 0.0
    %193 = vmatpush1.msra.mxu0 0.0
    %194 = vmatprep.subr.mxu0 0.0
    %195 = vmatpush1.msra.mxu0 0.0
    %196 = vmatprep.subr.mxu0 0.0
    %197 = vmatpush1.msra.mxu0 0.0
    %198 = vmatprep.subr.mxu0 0.0
    %199 = vmatpush1.msra.mxu0 0.0
    %200 = vmatprep.subr.mxu0 0.0
    %201 = vmatpush1.msra.mxu0 0.0
    %202 = vmatprep.subr.mxu0 0.0
    %203 = vmatpush1.msra.mxu0 0.0
    %204 = vmatprep.subr.mxu0 0.0
    %205 = vmatpush1.msra.mxu0 0.0
    %206 = vmatprep.subr.mxu0 0.0
    %207 = vmatpush1.msra.mxu0 0.0
    %208 = vmatprep.subr.mxu0 0.0
    %209 = vmatpush1.msra.mxu0 0.0
    %210 = vmatprep.subr.mxu0 0.0
    %211 = vmatpush1.msra.mxu0 0.0
    %212 = vmatprep.subr.mxu0 0.0
    %213 = vmatpush1.msra.mxu0 0.0
    %214 = vmatprep.subr.mxu0 0.0
    %215 = vmatpush1.msra.mxu0 0.0
    %216 = vmatprep.subr.mxu0 0.0
    %217 = vmatpush1.msra.mxu0 0.0
    %218 = vmatprep.subr.mxu0 0.0
    %219 = vmatpush1.msra.mxu0 0.0
    %220 = vmatprep.subr.mxu0 0.0
    %221 = vmatpush1.msra.mxu0 0.0
    %222 = vmatprep.subr.mxu0 0.0
    %223 = vmatpush1.msra.mxu0 0.0
    %224 = vmatprep.subr.mxu0 0.0
    %225 = vmatpush1.msra.mxu0 0.0
    %226 = vmatprep.subr.mxu0 0.0
    %227 = vmatpush1.msra.mxu0 0.0
    %228 = vmatprep.subr.mxu0 0.0
    %229 = vmatpush1.msra.mxu0 0.0
    %230 = vmatprep.subr.mxu0 0.0
    %231 = vmatpush1.msra.mxu0 0.0
    %232 = vmatprep.subr.mxu0 0.0
    %233 = vmatpush1.msra.mxu0 0.0
    %234 = vmatprep.mubr.f32.mxu0 0.0
    %235 = vmatmul.mubr.f32.gmra.mrb[0].mxu0 %v165
    %v236 = vpop.f32.mrb[0].mxu0
    %v237 = vadd.f32 %v163, %v236
    %v238 = vpop.f32.mrb[0].mxu0
    %239 = vmatprep.mubr.f32.mxu0 0.0
    %240 = vmatmul.mubr.f32.gmra.mrb[0].mxu0 %v168
    %v241 = vpop.f32.mrb[0].mxu0
    %v242 = vadd.f32 %v163, %v241
    %v243 = vpop.f32.mrb[0].mxu0
    %244 = vdwg.mxu0
    %245 = vrot.lane.b32.xlu0 %v237, 96
    %v246 = vpop.permute.xlu0 %245
    %247 = vrot.lane.b32.xlu0 %v242, 96
    %v248 = vpop.permute.xlu0 %247
    %v249 = vmul.f32 %v237, %v102
    %v250 = vmul.f32 %v237, %v103
    %v251 = vmul.f32 %v237, %v104
    %v252 = vmul.f32 %v237, %v105
    %v253 = vmul.f32 %v242, %v106
    %v254 = vmul.f32 %v242, %v107
    %v255 = vmul.f32 %v242, %v108
    %v256 = vmul.f32 %v242, %v109
    %257 = vmatprep.subr.mxu0 0.0
    %258 = vmatpush1.xpose.msra.mxu0 %v246
    %259 = vmatprep.subr.mxu0 0.0
    %260 = vmatpush1.xpose.msra.mxu0 %v248
    %261 = vmatprep.subr.mxu0 0.0
    %262 = vmatpush1.xpose.msra.mxu0 0.0
    %263 = vmatprep.subr.mxu0 0.0
    %264 = vmatpush1.xpose.msra.mxu0 0.0
    %265 = vmatprep.subr.mxu0 0.0
    %266 = vmatpush1.xpose.msra.mxu0 0.0
    %267 = vmatprep.subr.mxu0 0.0
    %268 = vmatpush1.xpose.msra.mxu0 0.0
    %269 = vmatprep.subr.mxu0 0.0
    %270 = vmatpush1.xpose.msra.mxu0 0.0
    %271 = vmatprep.subr.mxu0 0.0
    %272 = vmatpush1.xpose.msra.mxu0 0.0
    %273 = vmatprep.subr.mxu0 0.0
    %274 = vmatpush1.xpose.msra.mxu0 0.0
    %275 = vmatprep.subr.mxu0 0.0
    %276 = vmatpush1.xpose.msra.mxu0 0.0
    %277 = vmatprep.subr.mxu0 0.0
    %278 = vmatpush1.xpose.msra.mxu0 0.0
    %279 = vmatprep.subr.mxu0 0.0
    %280 = vmatpush1.xpose.msra.mxu0 0.0
    %281 = vmatprep.subr.mxu0 0.0
    %282 = vmatpush1.xpose.msra.mxu0 0.0
    %283 = vmatprep.subr.mxu0 0.0
    %284 = vmatpush1.xpose.msra.mxu0 0.0
    %285 = vmatprep.subr.mxu0 0.0
    %286 = vmatpush1.xpose.msra.mxu0 0.0
    %287 = vmatprep.subr.mxu0 0.0
    %288 = vmatpush1.xpose.msra.mxu0 0.0
    %289 = vmatprep.subr.mxu0 0.0
    %290 = vmatpush1.xpose.msra.mxu0 0.0
    %291 = vmatprep.subr.mxu0 0.0
    %292 = vmatpush1.xpose.msra.mxu0 0.0
    %293 = vmatprep.subr.mxu0 0.0
    %294 = vmatpush1.xpose.msra.mxu0 0.0
    %295 = vmatprep.subr.mxu0 0.0
    %296 = vmatpush1.xpose.msra.mxu0 0.0
    %297 = vmatprep.subr.mxu0 0.0
    %298 = vmatpush1.xpose.msra.mxu0 0.0
    %299 = vmatprep.subr.mxu0 0.0
    %300 = vmatpush1.xpose.msra.mxu0 0.0
    %301 = vmatprep.subr.mxu0 0.0
    %302 = vmatpush1.xpose.msra.mxu0 0.0
    %303 = vmatprep.subr.mxu0 0.0
    %304 = vmatpush1.xpose.msra.mxu0 0.0
    %305 = vmatprep.subr.mxu0 0.0
    %306 = vmatpush1.xpose.msra.mxu0 0.0
    %307 = vmatprep.subr.mxu0 0.0
    %308 = vmatpush1.xpose.msra.mxu0 0.0
    %309 = vmatprep.subr.mxu0 0.0
    %310 = vmatpush1.xpose.msra.mxu0 0.0
    %311 = vmatprep.subr.mxu0 0.0
    %312 = vmatpush1.xpose.msra.mxu0 0.0
    %313 = vmatprep.subr.mxu0 0.0
    %314 = vmatpush1.xpose.msra.mxu0 0.0
    %315 = vmatprep.subr.mxu0 0.0
    %316 = vmatpush1.xpose.msra.mxu0 0.0
    %317 = vmatprep.subr.mxu0 0.0
    %318 = vmatpush1.xpose.msra.mxu0 0.0
    %319 = vmatprep.subr.mxu0 0.0
    %320 = vmatpush1.xpose.msra.mxu0 0.0
    %321 = vmatprep.mubr.f32.mxu0 0.0
    %322 = vmatmul.mubr.f32.gmra.mrb[0].mxu0 %v249
    %v323 = vpop.f32.mrb[0].mxu0
    %v324 = vadd.f32 %v110, %v323
    %v325 = vpop.f32.mrb[0].mxu0
    %326 = vmatprep.mubr.f32.mxu0 0.0
    %327 = vmatmul.mubr.f32.gmra.mrb[0].mxu0 %v250
    %v328 = vpop.f32.mrb[0].mxu0
    %v329 = vadd.f32 %v111, %v328
    %v330 = vpop.f32.mrb[0].mxu0
    %331 = vmatprep.mubr.f32.mxu0 0.0
    %332 = vmatmul.mubr.f32.gmra.mrb[0].mxu0 %v251
    %v333 = vpop.f32.mrb[0].mxu0
    %v334 = vadd.f32 %v112, %v333
    %v335 = vpop.f32.mrb[0].mxu0
    %336 = vmatprep.mubr.f32.mxu0 0.0
    %337 = vmatmul.mubr.f32.gmra.mrb[0].mxu0 %v252
    %v338 = vpop.f32.mrb[0].mxu0
    %v339 = vadd.f32 %v113, %v338
    %v340 = vpop.f32.mrb[0].mxu0
    %341 = vmatprep.mubr.f32.mxu0 0.0
    %342 = vmatmul.mubr.f32.gmra.mrb[0].mxu0 %v253
    %v343 = vpop.f32.mrb[0].mxu0
    %v344 = vadd.f32 %v114, %v343
    %v345 = vpop.f32.mrb[0].mxu0
    %346 = vmatprep.mubr.f32.mxu0 0.0
    %347 = vmatmul.mubr.f32.gmra.mrb[0].mxu0 %v254
    %v348 = vpop.f32.mrb[0].mxu0
    %v349 = vadd.f32 %v115, %v348
    %v350 = vpop.f32.mrb[0].mxu0
    %351 = vmatprep.mubr.f32.mxu0 0.0
    %352 = vmatmul.mubr.f32.gmra.mrb[0].mxu0 %v255
    %v353 = vpop.f32.mrb[0].mxu0
    %v354 = vadd.f32 %v116, %v353
    %v355 = vpop.f32.mrb[0].mxu0
    %356 = vmatprep.mubr.f32.mxu0 0.0
    %357 = vmatmul.mubr.f32.gmra.mrb[0].mxu0 %v256
    %v358 = vpop.f32.mrb[0].mxu0
    %v359 = vadd.f32 %v117, %v358
    %v360 = vpop.f32.mrb[0].mxu0
    %361 = vdwg.mxu0
    %vm362 = vcmask 130048
    %v363 = vsel %vm362, %v324, -inf
    %364 = vmax.xlane.f32.xlu0 %v363
    %v365 = vpop.xlane.xlu0 %364
    %v366 = vsel %vm362, %v329, -inf
    %367 = vmax.xlane.f32.xlu0 %v366
    %v368 = vpop.xlane.xlu0 %367
    %v369 = vsel %vm362, %v334, -inf
    %370 = vmax.xlane.f32.xlu0 %v369
    %v371 = vpop.xlane.xlu0 %370
    %v372 = vsel %vm362, %v339, -inf
    %373 = vmax.xlane.f32.xlu0 %v372
    %v374 = vpop.xlane.xlu0 %373
    %v375 = vsel %vm362, %v344, -inf
    %376 = vmax.xlane.f32.xlu0 %v375
    %v377 = vpop.xlane.xlu0 %376
    %v378 = vsel %vm362, %v349, -inf
    %379 = vmax.xlane.f32.xlu0 %v378
    %v380 = vpop.xlane.xlu0 %379
    %v381 = vsel %vm362, %v354, -inf
    %382 = vmax.xlane.f32.xlu0 %v381
    %v383 = vpop.xlane.xlu0 %382
    %v384 = vsel %vm362, %v359, -inf
    %385 = vmax.xlane.f32.xlu0 %v384
    %v386 = vpop.xlane.xlu0 %385
    %v387 = vsub.f32 %v324, %v365
    %v388 = vsub.f32 %v329, %v368
    %v389 = vsub.f32 %v334, %v371
    %v390 = vsub.f32 %v339, %v374
    %v391 = vsub.f32 %v344, %v377
    %v392 = vsub.f32 %v349, %v380
    %v393 = vsub.f32 %v354, %v383
    %v394 = vsub.f32 %v359, %v386
    %v395 = vmul.f32 %v387, 1.442695
    %v396 = vpow.pop %v395
    %v397 = vmul.f32 %v388, 1.442695
    %v398 = vpow.pop %v397
    %v399 = vmul.f32 %v389, 1.442695
    %v400 = vpow.pop %v399
    %v401 = vmul.f32 %v390, 1.442695
    %v402 = vpow.pop %v401
    %v403 = vmul.f32 %v391, 1.442695
    %v404 = vpow.pop %v403
    %v405 = vmul.f32 %v392, 1.442695
    %v406 = vpow.pop %v405
    %v407 = vmul.f32 %v393, 1.442695
    %v408 = vpow.pop %v407
    %v409 = vmul.f32 %v394, 1.442695
    %v410 = vpow.pop %v409
    %v411 = vsel %vm362, %v396, 0.0
    %412 = vadd.xlane.f32.xlu0 %v411
    %v413 = vpop.xlane.xlu0 %412
    %v414 = vsel %vm362, %v398, 0.0
    %415 = vadd.xlane.f32.xlu0 %v414
    %v416 = vpop.xlane.xlu0 %415
    %v417 = vsel %vm362, %v400, 0.0
    %418 = vadd.xlane.f32.xlu0 %v417
    %v419 = vpop.xlane.xlu0 %418
    %v420 = vsel %vm362, %v402, 0.0
    %421 = vadd.xlane.f32.xlu0 %v420
    %v422 = vpop.xlane.xlu0 %421
    %v423 = vsel %vm362, %v404, 0.0
    %424 = vadd.xlane.f32.xlu0 %v423
    %v425 = vpop.xlane.xlu0 %424
    %v426 = vsel %vm362, %v406, 0.0
    %427 = vadd.xlane.f32.xlu0 %v426
    %v428 = vpop.xlane.xlu0 %427
    %v429 = vsel %vm362, %v408, 0.0
    %430 = vadd.xlane.f32.xlu0 %v429
    %v431 = vpop.xlane.xlu0 %430
    %v432 = vsel %vm362, %v410, 0.0
    %433 = vadd.xlane.f32.xlu0 %v432
    %v434 = vpop.xlane.xlu0 %433
    %v435 = vrcp.pop %v413
    %v436 = vrcp.pop %v416
    %v437 = vrcp.pop %v419
    %v438 = vrcp.pop %v422
    %v439 = vrcp.pop %v425
    %v440 = vrcp.pop %v428
    %v441 = vrcp.pop %v431
    %v442 = vrcp.pop %v434
    %v443 = vmul.f32 %v396, %v435
    %v444 = vmul.f32 %v398, %v436
    %v445 = vmul.f32 %v400, %v437
    %v446 = vmul.f32 %v402, %v438
    %v447 = vmul.f32 %v404, %v439
    %v448 = vmul.f32 %v406, %v440
    %v449 = vmul.f32 %v408, %v441
    %v450 = vmul.f32 %v410, %v442
    %v452 = vsel %vm362, %v443, 0
    %v455 = vsel %vm362, %v444, 0
    %v458 = vsel %vm362, %v445, 0
    %v461 = vsel %vm362, %v446, 0
    %v464 = vsel %vm362, %v447, 0
    %v467 = vsel %vm362, %v448, 0
    %v470 = vsel %vm362, %v449, 0
    %v473 = vsel %vm362, %v450, 0
    %475 = vmatprep.subr.mxu0 0.0
    %476 = vmatpush1.msra.mxu0 %v237
    %477 = vmatprep.subr.mxu0 0.0
    %478 = vmatpush1.msra.mxu0 %v242
    %479 = vmatprep.subr.mxu0 0.0
    %480 = vmatpush1.msra.mxu0 0.0
    %481 = vmatprep.subr.mxu0 0.0
    %482 = vmatpush1.msra.mxu0 0.0
    %483 = vmatprep.subr.mxu0 0.0
    %484 = vmatpush1.msra.mxu0 0.0
    %485 = vmatprep.subr.mxu0 0.0
    %486 = vmatpush1.msra.mxu0 0.0
    %487 = vmatprep.subr.mxu0 0.0
    %488 = vmatpush1.msra.mxu0 0.0
    %489 = vmatprep.subr.mxu0 0.0
    %490 = vmatpush1.msra.mxu0 0.0
    %491 = vmatprep.subr.mxu0 0.0
    %492 = vmatpush1.msra.mxu0 0.0
    %493 = vmatprep.subr.mxu0 0.0
    %494 = vmatpush1.msra.mxu0 0.0
    %495 = vmatprep.subr.mxu0 0.0
    %496 = vmatpush1.msra.mxu0 0.0
    %497 = vmatprep.subr.mxu0 0.0
    %498 = vmatpush1.msra.mxu0 0.0
    %499 = vmatprep.subr.mxu0 0.0
    %500 = vmatpush1.msra.mxu0 0.0
    %501 = vmatprep.subr.mxu0 0.0
    %502 = vmatpush1.msra.mxu0 0.0
    %503 = vmatprep.subr.mxu0 0.0
    %504 = vmatpush1.msra.mxu0 0.0
    %505 = vmatprep.subr.mxu0 0.0
    %506 = vmatpush1.msra.mxu0 0.0
    %507 = vmatprep.subr.mxu0 0.0
    %508 = vmatpush1.msra.mxu0 0.0
    %509 = vmatprep.subr.mxu0 0.0
    %510 = vmatpush1.msra.mxu0 0.0
    %511 = vmatprep.subr.mxu0 0.0
    %512 = vmatpush1.msra.mxu0 0.0
    %513 = vmatprep.subr.mxu0 0.0
    %514 = vmatpush1.msra.mxu0 0.0
    %515 = vmatprep.subr.mxu0 0.0
    %516 = vmatpush1.msra.mxu0 0.0
    %517 = vmatprep.subr.mxu0 0.0
    %518 = vmatpush1.msra.mxu0 0.0
    %519 = vmatprep.subr.mxu0 0.0
    %520 = vmatpush1.msra.mxu0 0.0
    %521 = vmatprep.subr.mxu0 0.0
    %522 = vmatpush1.msra.mxu0 0.0
    %523 = vmatprep.subr.mxu0 0.0
    %524 = vmatpush1.msra.mxu0 0.0
    %525 = vmatprep.subr.mxu0 0.0
    %526 = vmatpush1.msra.mxu0 0.0
    %527 = vmatprep.subr.mxu0 0.0
    %528 = vmatpush1.msra.mxu0 0.0
    %529 = vmatprep.subr.mxu0 0.0
    %530 = vmatpush1.msra.mxu0 0.0
    %531 = vmatprep.subr.mxu0 0.0
    %532 = vmatpush1.msra.mxu0 0.0
    %533 = vmatprep.subr.mxu0 0.0
    %534 = vmatpush1.msra.mxu0 0.0
    %535 = vmatprep.subr.mxu0 0.0
    %536 = vmatpush1.msra.mxu0 0.0
    %537 = vmatprep.subr.mxu0 0.0
    %538 = vmatpush1.msra.mxu0 0.0
    %539 = vmatprep.mubr.f32.mxu0 0.0
    %540 = vmatmul.mubr.f32.gmra.mrb[0].mxu0 %v452
    %v541 = vpop.f32.mrb[0].mxu0
    %v542 = vadd.f32 0.0, %v541
    %v543 = vpop.f32.mrb[0].mxu0
    %544 = vmatprep.mubr.f32.mxu0 0.0
    %545 = vmatmul.mubr.f32.gmra.mrb[0].mxu0 %v455
    %v546 = vpop.f32.mrb[0].mxu0
    %v547 = vadd.f32 0.0, %v546
    %v548 = vpop.f32.mrb[0].mxu0
    %549 = vmatprep.mubr.f32.mxu0 0.0
    %550 = vmatmul.mubr.f32.gmra.mrb[0].mxu0 %v458
    %v551 = vpop.f32.mrb[0].mxu0
    %v552 = vadd.f32 0.0, %v551
    %v553 = vpop.f32.mrb[0].mxu0
    %554 = vmatprep.mubr.f32.mxu0 0.0
    %555 = vmatmul.mubr.f32.gmra.mrb[0].mxu0 %v461
    %v556 = vpop.f32.mrb[0].mxu0
    %v557 = vadd.f32 0.0, %v556
    %v558 = vpop.f32.mrb[0].mxu0
    %559 = vmatprep.mubr.f32.mxu0 0.0
    %560 = vmatmul.mubr.f32.gmra.mrb[0].mxu0 %v464
    %v561 = vpop.f32.mrb[0].mxu0
    %v562 = vadd.f32 0.0, %v561
    %v563 = vpop.f32.mrb[0].mxu0
    %564 = vmatprep.mubr.f32.mxu0 0.0
    %565 = vmatmul.mubr.f32.gmra.mrb[0].mxu0 %v467
    %v566 = vpop.f32.mrb[0].mxu0
    %v567 = vadd.f32 0.0, %v566
    %v568 = vpop.f32.mrb[0].mxu0
    %569 = vmatprep.mubr.f32.mxu0 0.0
    %570 = vmatmul.mubr.f32.gmra.mrb[0].mxu0 %v470
    %v571 = vpop.f32.mrb[0].mxu0
    %v572 = vadd.f32 0.0, %v571
    %v573 = vpop.f32.mrb[0].mxu0
    %574 = vmatprep.mubr.f32.mxu0 0.0
    %575 = vmatmul.mubr.f32.gmra.mrb[0].mxu0 %v473
    %v576 = vpop.f32.mrb[0].mxu0
    %v577 = vadd.f32 0.0, %v576
    %v578 = vpop.f32.mrb[0].mxu0
    %579 = vdwg.mxu0
    %v580 = vmul.f32 %v542, %v102
    %v581 = vmul.f32 %v547, %v103
    %v582 = vmul.f32 %v552, %v104
    %v583 = vmul.f32 %v557, %v105
    %v584 = vmul.f32 %v562, %v106
    %v585 = vmul.f32 %v567, %v107
    %v586 = vmul.f32 %v572, %v108
    %v587 = vmul.f32 %v577, %v109
    %v588 = vadd.f32 %v580, %v581
    %v589 = vadd.f32 %v588, %v582
    %v590 = vadd.f32 %v589, %v583
    %v591 = vadd.f32 %v584, %v585
    %v592 = vadd.f32 %v591, %v586
    %v593 = vadd.f32 %v592, %v587
    %v594 = vlaneseq
    %v595 = vshrl.u32 %v594, 7
    %v596 = vsub.s32 0, %v595
    %v597 = vrot.slane %v57, %v596
    %598 = vmatprep.subr.mxu0 0.0
    %599 = vmatpush1.msra.mxu0 %v86
    %600 = vmatprep.subr.mxu0 0.0
    %601 = vmatpush1.msra.mxu0 %v87
    %602 = vmatprep.subr.mxu0 0.0
    %603 = vmatpush1.msra.mxu0 %v88
    %604 = vmatprep.subr.mxu0 0.0
    %605 = vmatpush1.msra.mxu0 %v89
    %606 = vmatprep.subr.mxu0 0.0
    %607 = vmatpush1.msra.mxu0 %v90
    %608 = vmatprep.subr.mxu0 0.0
    %609 = vmatpush1.msra.mxu0 %v91
    %610 = vmatprep.subr.mxu0 0.0
    %611 = vmatpush1.msra.mxu0 %v92
    %612 = vmatprep.subr.mxu0 0.0
    %613 = vmatpush1.msra.mxu0 %v93
    %614 = vmatprep.subr.mxu0 0.0
    %615 = vmatpush1.msra.mxu0 %v94
    %616 = vmatprep.subr.mxu0 0.0
    %617 = vmatpush1.msra.mxu0 %v95
    %618 = vmatprep.subr.mxu0 0.0
    %619 = vmatpush1.msra.mxu0 %v96
    %620 = vmatprep.subr.mxu0 0.0
    %621 = vmatpush1.msra.mxu0 %v97
    %622 = vmatprep.subr.mxu0 0.0
    %623 = vmatpush1.msra.mxu0 %v98
    %624 = vmatprep.subr.mxu0 0.0
    %625 = vmatpush1.msra.mxu0 %v99
    %626 = vmatprep.subr.mxu0 0.0
    %627 = vmatpush1.msra.mxu0 %v100
    %628 = vmatprep.subr.mxu0 0.0
    %629 = vmatpush1.msra.mxu0 %v101
    %630 = vmatprep.subr.mxu0 0.0
    %631 = vmatpush1.msra.mxu0 0.0
    %632 = vmatprep.subr.mxu0 0.0
    %633 = vmatpush1.msra.mxu0 0.0
    %634 = vmatprep.subr.mxu0 0.0
    %635 = vmatpush1.msra.mxu0 0.0
    %636 = vmatprep.subr.mxu0 0.0
    %637 = vmatpush1.msra.mxu0 0.0
    %638 = vmatprep.subr.mxu0 0.0
    %639 = vmatpush1.msra.mxu0 0.0
    %640 = vmatprep.subr.mxu0 0.0
    %641 = vmatpush1.msra.mxu0 0.0
    %642 = vmatprep.subr.mxu0 0.0
    %643 = vmatpush1.msra.mxu0 0.0
    %644 = vmatprep.subr.mxu0 0.0
    %645 = vmatpush1.msra.mxu0 0.0
    %646 = vmatprep.subr.mxu0 0.0
    %647 = vmatpush1.msra.mxu0 0.0
    %648 = vmatprep.subr.mxu0 0.0
    %649 = vmatpush1.msra.mxu0 0.0
    %650 = vmatprep.subr.mxu0 0.0
    %651 = vmatpush1.msra.mxu0 0.0
    %652 = vmatprep.subr.mxu0 0.0
    %653 = vmatpush1.msra.mxu0 0.0
    %654 = vmatprep.subr.mxu0 0.0
    %655 = vmatpush1.msra.mxu0 0.0
    %656 = vmatprep.subr.mxu0 0.0
    %657 = vmatpush1.msra.mxu0 0.0
    %658 = vmatprep.subr.mxu0 0.0
    %659 = vmatpush1.msra.mxu0 0.0
    %660 = vmatprep.subr.mxu0 0.0
    %661 = vmatpush1.msra.mxu0 0.0
    %662 = vmatprep.mubr.f32.mxu0 0.0
    %663 = vmatmul.mubr.f32.gmra.mrb[0].mxu0 %v590
    %v664 = vpop.f32.mrb[0].mxu0
    %v665 = vadd.f32 %v597, %v664
    %v666 = vpop.f32.mrb[0].mxu0
    %667 = vmatprep.mubr.f32.mxu0 0.0
    %668 = vmatmul.mubr.f32.gmra.mrb[0].mxu0 %v593
    %v669 = vpop.f32.mrb[0].mxu0
    %v670 = vadd.f32 %v597, %v669
    %v671 = vpop.f32.mrb[0].mxu0
    %672 = vdwg.mxu0
    %v673 = vadd.f32 %v118, %v665
    %v674 = vadd.f32 %v119, %v670
    %v675 = vsel %vm120, %v673, 0.0
    %676 = vadd.xlane.f32.xlu0 %v675
    %v677 = vpop.xlane.xlu0 %676
    %v678 = vsel %vm120, %v674, 0.0
    %679 = vadd.xlane.f32.xlu0 %v678
    %v680 = vpop.xlane.xlu0 %679
    %v681 = vmul.f32 %v677, %v127
    %v682 = vmul.f32 %v680, %v127
    %v683 = vsub.f32 %v673, %v681
    %v684 = vsub.f32 %v674, %v682
    %v685 = vmul.f32 %v683, %v683
    %v686 = vmul.f32 %v684, %v684
    %v687 = vsel %vm120, %v685, 0.0
    %688 = vadd.xlane.f32.xlu0 %v687
    %v689 = vpop.xlane.xlu0 %688
    %v690 = vsel %vm120, %v686, 0.0
    %691 = vadd.xlane.f32.xlu0 %v690
    %v692 = vpop.xlane.xlu0 %691
    %v693 = vmul.f32 %v689, %v127
    %v694 = vmul.f32 %v692, %v127
    %v695 = vadd.f32 %v693, 1e-05
    %v696 = vadd.f32 %v694, 1e-05
    %v697 = vrsqrt.pop %v695
    %v698 = vrsqrt.pop %v696
    %v699 = vmul.f32 %v683, %v697
    %v700 = vmul.f32 %v684, %v698
    %v701 = vlaneseq
    %v702 = vshrl.u32 %v701, 7
    %v703 = vsub.s32 0, %v702
    %v704 = vrot.slane %v58, %v703
    %v705 = vmul.f32 %v699, %v704
    %v706 = vmul.f32 %v700, %v704
    %v707 = vlaneseq
    %v708 = vshrl.u32 %v707, 7
    %v709 = vsub.s32 0, %v708
    %v710 = vrot.slane %v59, %v709
    %v711 = vadd.f32 %v705, %v710
    %v712 = vadd.f32 %v706, %v710
    %v713 = vlaneseq
    %v714 = vshrl.u32 %v713, 7
    %v715 = vsub.s32 0, %v714
    %v716 = vrot.slane %v60, %v715
    %v718 = vsel %vm120, %v711, 0
    %v721 = vsel %vm120, %v712, 0
    %723 = vmatprep.subr.mxu0 0.0
    %724 = vmatpush1.msra.mxu0 %v66
    %725 = vmatprep.subr.mxu0 0.0
    %726 = vmatpush1.msra.mxu0 %v67
    %727 = vmatprep.subr.mxu0 0.0
    %728 = vmatpush1.msra.mxu0 %v68
    %729 = vmatprep.subr.mxu0 0.0
    %730 = vmatpush1.msra.mxu0 %v69
    %731 = vmatprep.subr.mxu0 0.0
    %732 = vmatpush1.msra.mxu0 0.0
    %733 = vmatprep.subr.mxu0 0.0
    %734 = vmatpush1.msra.mxu0 0.0
    %735 = vmatprep.subr.mxu0 0.0
    %736 = vmatpush1.msra.mxu0 0.0
    %737 = vmatprep.subr.mxu0 0.0
    %738 = vmatpush1.msra.mxu0 0.0
    %739 = vmatprep.subr.mxu0 0.0
    %740 = vmatpush1.msra.mxu0 0.0
    %741 = vmatprep.subr.mxu0 0.0
    %742 = vmatpush1.msra.mxu0 0.0
    %743 = vmatprep.subr.mxu0 0.0
    %744 = vmatpush1.msra.mxu0 0.0
    %745 = vmatprep.subr.mxu0 0.0
    %746 = vmatpush1.msra.mxu0 0.0
    %747 = vmatprep.subr.mxu0 0.0
    %748 = vmatpush1.msra.mxu0 0.0
    %749 = vmatprep.subr.mxu0 0.0
    %750 = vmatpush1.msra.mxu0 0.0
    %751 = vmatprep.subr.mxu0 0.0
    %752 = vmatpush1.msra.mxu0 0.0
    %753 = vmatprep.subr.mxu0 0.0
    %754 = vmatpush1.msra.mxu0 0.0
    %755 = vmatprep.subr.mxu0 0.0
    %756 = vmatpush1.msra.mxu0 0.0
    %757 = vmatprep.subr.mxu0 0.0
    %758 = vmatpush1.msra.mxu0 0.0
    %759 = vmatprep.subr.mxu0 0.0
    %760 = vmatpush1.msra.mxu0 0.0
    %761 = vmatprep.subr.mxu0 0.0
    %762 = vmatpush1.msra.mxu0 0.0
    %763 = vmatprep.subr.mxu0 0.0
    %764 = vmatpush1.msra.mxu0 0.0
    %765 = vmatprep.subr.mxu0 0.0
    %766 = vmatpush1.msra.mxu0 0.0
    %767 = vmatprep.subr.mxu0 0.0
    %768 = vmatpush1.msra.mxu0 0.0
    %769 = vmatprep.subr.mxu0 0.0
    %770 = vmatpush1.msra.mxu0 0.0
    %771 = vmatprep.subr.mxu0 0.0
    %772 = vmatpush1.msra.mxu0 0.0
    %773 = vmatprep.subr.mxu0 0.0
    %774 = vmatpush1.msra.mxu0 0.0
    %775 = vmatprep.subr.mxu0 0.0
    %776 = vmatpush1.msra.mxu0 0.0
    %777 = vmatprep.subr.mxu0 0.0
    %778 = vmatpush1.msra.mxu0 0.0
    %779 = vmatprep.subr.mxu0 0.0
    %780 = vmatpush1.msra.mxu0 0.0
    %781 = vmatprep.subr.mxu0 0.0
    %782 = vmatpush1.msra.mxu0 0.0
    %783 = vmatprep.subr.mxu0 0.0
    %784 = vmatpush1.msra.mxu0 0.0
    %785 = vmatprep.subr.mxu0 0.0
    %786 = vmatpush1.msra.mxu0 0.0
    %787 = vmatprep.mubr.f32.mxu0 0.0
    %788 = vmatmul.mubr.f32.gmra.mrb[0].mxu0 %v718
    %v789 = vpop.f32.mrb[0].mxu0
    %v790 = vadd.f32 %v716, %v789
    %v791 = vpop.f32.mrb[0].mxu0
    %792 = vmatprep.mubr.f32.mxu0 0.0
    %793 = vmatmul.mubr.f32.gmra.mrb[0].mxu0 %v721
    %v794 = vpop.f32.mrb[0].mxu0
    %v795 = vadd.f32 %v716, %v794
    %v796 = vpop.f32.mrb[0].mxu0
    %797 = vdwg.mxu0
    %v798 = vmul.f32 %v790, 1.702
    %v799 = vmul.f32 %v795, 1.702
    %v800 = vxor.u32 %v798, 2147483648
    %v801 = vxor.u32 %v799, 2147483648
    %v802 = vmul.f32 %v800, 1.442695
    %v803 = vpow.pop %v802
    %v804 = vmul.f32 %v801, 1.442695
    %v805 = vpow.pop %v804
    %v806 = vadd.f32 %v803, 1.0
    %v807 = vadd.f32 %v805, 1.0
    %v808 = vrcp.pop %v806
    %v809 = vmul.f32 1.0, %v808
    %v810 = vrcp.pop %v807
    %v811 = vmul.f32 1.0, %v810
    %v812 = vmul.f32 %v790, %v809
    %v813 = vmul.f32 %v795, %v811
    %v814 = vlaneseq
    %v815 = vshrl.u32 %v814, 7
    %v816 = vsub.s32 0, %v815
    %v817 = vrot.slane %v61, %v816
    %818 = vmatprep.subr.mxu0 0.0
    %819 = vmatpush1.msra.mxu0 %v70
    %820 = vmatprep.subr.mxu0 0.0
    %821 = vmatpush1.msra.mxu0 %v71
    %822 = vmatprep.subr.mxu0 0.0
    %823 = vmatpush1.msra.mxu0 %v72
    %824 = vmatprep.subr.mxu0 0.0
    %825 = vmatpush1.msra.mxu0 %v73
    %826 = vmatprep.subr.mxu0 0.0
    %827 = vmatpush1.msra.mxu0 %v74
    %828 = vmatprep.subr.mxu0 0.0
    %829 = vmatpush1.msra.mxu0 %v75
    %830 = vmatprep.subr.mxu0 0.0
    %831 = vmatpush1.msra.mxu0 %v76
    %832 = vmatprep.subr.mxu0 0.0
    %833 = vmatpush1.msra.mxu0 %v77
    %834 = vmatprep.subr.mxu0 0.0
    %835 = vmatpush1.msra.mxu0 %v78
    %836 = vmatprep.subr.mxu0 0.0
    %837 = vmatpush1.msra.mxu0 %v79
    %838 = vmatprep.subr.mxu0 0.0
    %839 = vmatpush1.msra.mxu0 %v80
    %840 = vmatprep.subr.mxu0 0.0
    %841 = vmatpush1.msra.mxu0 %v81
    %842 = vmatprep.subr.mxu0 0.0
    %843 = vmatpush1.msra.mxu0 %v82
    %844 = vmatprep.subr.mxu0 0.0
    %845 = vmatpush1.msra.mxu0 %v83
    %846 = vmatprep.subr.mxu0 0.0
    %847 = vmatpush1.msra.mxu0 %v84
    %848 = vmatprep.subr.mxu0 0.0
    %849 = vmatpush1.msra.mxu0 %v85
    %850 = vmatprep.subr.mxu0 0.0
    %851 = vmatpush1.msra.mxu0 0.0
    %852 = vmatprep.subr.mxu0 0.0
    %853 = vmatpush1.msra.mxu0 0.0
    %854 = vmatprep.subr.mxu0 0.0
    %855 = vmatpush1.msra.mxu0 0.0
    %856 = vmatprep.subr.mxu0 0.0
    %857 = vmatpush1.msra.mxu0 0.0
    %858 = vmatprep.subr.mxu0 0.0
    %859 = vmatpush1.msra.mxu0 0.0
    %860 = vmatprep.subr.mxu0 0.0
    %861 = vmatpush1.msra.mxu0 0.0
    %862 = vmatprep.subr.mxu0 0.0
    %863 = vmatpush1.msra.mxu0 0.0
    %864 = vmatprep.subr.mxu0 0.0
    %865 = vmatpush1.msra.mxu0 0.0
    %866 = vmatprep.subr.mxu0 0.0
    %867 = vmatpush1.msra.mxu0 0.0
    %868 = vmatprep.subr.mxu0 0.0
    %869 = vmatpush1.msra.mxu0 0.0
    %870 = vmatprep.subr.mxu0 0.0
    %871 = vmatpush1.msra.mxu0 0.0
    %872 = vmatprep.subr.mxu0 0.0
    %873 = vmatpush1.msra.mxu0 0.0
    %874 = vmatprep.subr.mxu0 0.0
    %875 = vmatpush1.msra.mxu0 0.0
    %876 = vmatprep.subr.mxu0 0.0
    %877 = vmatpush1.msra.mxu0 0.0
    %878 = vmatprep.subr.mxu0 0.0
    %879 = vmatpush1.msra.mxu0 0.0
    %880 = vmatprep.subr.mxu0 0.0
    %881 = vmatpush1.msra.mxu0 0.0
    %882 = vmatprep.mubr.f32.mxu0 0.0
    %883 = vmatmul.mubr.f32.gmra.mrb[0].mxu0 %v812
    %v884 = vpop.f32.mrb[0].mxu0
    %v885 = vadd.f32 %v817, %v884
    %v886 = vpop.f32.mrb[0].mxu0
    %887 = vmatprep.mubr.f32.mxu0 0.0
    %888 = vmatmul.mubr.f32.gmra.mrb[0].mxu0 %v813
    %v889 = vpop.f32.mrb[0].mxu0
    %v890 = vadd.f32 %v817, %v889
    %v891 = vpop.f32.mrb[0].mxu0
    %892 = vdwg.mxu0
    %v893 = vadd.f32 %v673, %v885
    %v894 = vadd.f32 %v674, %v890
    %895 = vst.msk [vmem:[#allocation8] sm:$0xff] %vm120, %v893
    %896 = vst.msk [vmem:[#allocation8 + $0x8] sm:$0xff] %vm120, %v894
    // Predicated region
    $region26: #{tpu_custom_call.1} parent=1 // pred_check
      _
    $region27: #{tpu_custom_call.1} parent=1 // pred_check_branch
      %898 = sbr.rel (0) target = $region29
    $region28: #{tpu_custom_call.1} parent=1 // pred_region
      %s900 = ssub.s32 256, 256
      %901 = vsyncadd [#allocation4], %s900
      %s902 = sshll.u32 [#allocation8], 4
      %s903 = int_to_ptr.vmem [resolvable:$true] %s902
      %908 = dma.vmem_to_hbm [thread:$0]  %s903, 256, %s3, [#allocation4], 128, 128, 8
    $region29: #{tpu_custom_call.1} parent=1 // pred_fallthru
      _
    // Predicated region
    $region30: #{tpu_custom_call.1} parent=1 // pred_check
      _
    $region31: #{tpu_custom_call.1} parent=1 // pred_check_branch
      %910 = sbr.rel (0) target = $region33
    $region32: #{tpu_custom_call.1} parent=1 // pred_region
      %911 = dma.done [#allocation4], 256
    $region33: #{tpu_custom_call.1} parent=1 // pred_fallthru
      _
    %912 = vsyncpa [#allocation3], 1
    %913 = vsyncpa [#allocation6], 1
    %914 = vsyncpa [#allocation4], 1

</llo_original>
